<compile_context>
chip_gen: v6e
topology: v6e:2x2x1
jax: 0.10.0
libtpu: 0.0.40
codegen_flags: <defaults>
</compile_context>

<pallas_src>
import jax
import jax.numpy as jnp
from jax import lax
from jax.experimental import pallas as pl
from jax.experimental.pallas import tpu as pltpu


def _round_up(x, m):
    return ((x + m - 1) // m) * m


def _vmem_capacity_bytes():
    # Physical VMEM of the attached TPU (128 MiB on v5e/v6e, 64 MiB per-TC on v7x).
    try:
        cap = int(pltpu.get_tpu_info().vmem_capacity_bytes)
        if cap > 0:
            return cap
    except Exception:
        pass
    return 64 * 1024 * 1024  # conservative fallback (v7x per-TC)


def _estimate_step_vmem(tb, Dp, Hp):
    # Double-buffered bf16 z1/z2 tiles, double-buffered bf16 weights (index_map is
    # constant, so they are fetched once but still occupy 2 buffers), f32 h/p/z
    # intermediates.
    # TODO(synk): single-buffer the resident w1/b1/w2/b2 via pipeline_mode=pl.Buffered(1)
    # to halve the weight footprint once that path is verified on all generations.
    weights = 2 * 2 * Dp * Hp * 2                      # w1 + w2, bf16, x2 buffers
    z_io = 2 * 2 * tb * Dp * 2                         # z1 + z2, bf16, x2 buffers
    inter = 2 * tb * Hp * 4 + 4 * tb * Dp * 4          # h1/h2 f32 + p1/p2/z1f/z2f f32
    return weights + z_io + inter


def _pick_block_rows(B, Dp, Hp, requested, vmem_cap):
    # Leave ~45% headroom for compiler scratch / spill margin.
    budget = int(vmem_cap * 0.55)
    tb = _round_up(min(requested, max(B, 8)), 8)
    while tb > 8 and _estimate_step_vmem(tb, Dp, Hp) > budget:
        tb = _round_up(tb // 2, 8)
    return tb


def _simsiam_kernel(z1_ref, z2_ref, w1_ref, b1_ref, w2_ref, b2_ref, out_ref):
    z1 = z1_ref[...]                       # (tb, Dp) bf16
    z2 = z2_ref[...]                       # (tb, Dp) bf16
    w1 = w1_ref[...]                       # (Dp, Hp) bf16, VMEM-resident
    w2 = w2_ref[...]                       # (Hp, Dp) bf16, VMEM-resident
    b1 = b1_ref[...]                       # (1, Hp) f32
    b2 = b2_ref[...]                       # (1, Dp) f32

    def predict(z):
        # Linear -> ReLU -> Linear, f32 MXU accumulation, bf16 MXU operands.
        h = jnp.dot(z, w1, preferred_element_type=jnp.float32) + b1
        h = jnp.maximum(h, 0.0).astype(jnp.bfloat16)
        return jnp.dot(h, w2, preferred_element_type=jnp.float32) + b2

    p1 = predict(z1)                       # (tb, Dp) f32
    p2 = predict(z2)                       # (tb, Dp) f32

    # Cosine math in f32.
    z1f = z1.astype(jnp.float32)
    z2f = z2.astype(jnp.float32)

    eps2 = jnp.float32(1e-16)              # eps^2 clamp (~F.cosine_similarity)

    def cos_rows(p, z):
        # cos = (p.z) * rsqrt(max(|p|^2 |z|^2, eps^2)) — one EUP rsqrt, no divide.
        d = jnp.sum(p * z, axis=-1, keepdims=True)
        pp = jnp.sum(p * p, axis=-1, keepdims=True)
        zz = jnp.sum(z * z, axis=-1, keepdims=True)
        return d * lax.rsqrt(jnp.maximum(pp * zz, eps2))

    # Per-block partial sum (zero-padded rows contribute exactly 0: their z row is 0,
    # so the dot is 0 and the eps clamp makes cos == 0).
    partial = jnp.sum(cos_rows(p1, z2f) + cos_rows(p2, z1f))   # scalar f32

    # Lane-dense (8, 128) slab per block -> full unmasked stores; wrapper reduces.
    out_ref[...] = jnp.full(out_ref.shape, partial, dtype=jnp.float32)


def simsiam_forward(z1, z2, w1, b1, w2, b2, *, block_rows=None):
    # Mirror the PyTorch unsqueeze for 1-D inputs.
    if z1.ndim == 1:
        z1 = z1[None, :]
        z2 = z2[None, :]

    B, D = z1.shape
    H = w1.shape[-1]

    LANE = 128
    Dp = _round_up(D, LANE)
    Hp = _round_up(H, LANE)

    # bf16 MXU operands, zero-padded to full lane multiples (exact-result padding).
    w1p = jnp.pad(jnp.asarray(w1, jnp.bfloat16).reshape(D, H), ((0, Dp - D), (0, Hp - H)))
    w2p = jnp.pad(jnp.asarray(w2, jnp.bfloat16).reshape(H, D), ((0, Hp - H), (0, Dp - D)))
    b1p = jnp.pad(jnp.asarray(b1, jnp.float32).reshape(1, H), ((0, 0), (0, Hp - H)))
    b2p = jnp.pad(jnp.asarray(b2, jnp.float32).reshape(1, D), ((0, 0), (0, Dp - D)))

    # Stream activations as bf16 (halves HBM->VMEM bytes); upcast in-kernel for cosine.
    z1b = jnp.pad(z1.astype(jnp.bfloat16), ((0, 0), (0, Dp - D)))
    z2b = jnp.pad(z2.astype(jnp.bfloat16), ((0, 0), (0, Dp - D)))

    # Batch tile sized from the physical VMEM of the attached generation.
    vmem_cap = _vmem_capacity_bytes()
    requested = 1024 if block_rows is None else block_rows
    tb = _pick_block_rows(B, Dp, Hp, requested, vmem_cap)

    Bp = _round_up(B, tb)
    if Bp != B:
        pad = Bp - B
        # Zero rows -> cos == 0 exactly, so they don't bias the sum.
        z1b = jnp.pad(z1b, ((0, pad), (0, 0)))
        z2b = jnp.pad(z2b, ((0, pad), (0, 0)))
    num_blocks = Bp // tb

    est = _estimate_step_vmem(tb, Dp, Hp)
    vmem_limit = int(min(vmem_cap * 0.9, max(32 * 1024 * 1024, est * 1.5)))

    partials = pl.pallas_call(
        _simsiam_kernel,
        out_shape=jax.ShapeDtypeStruct((num_blocks, 8, 128), jnp.float32),
        grid_spec=pltpu.PrefetchScalarGridSpec(
            num_scalar_prefetch=0,
            grid=(num_blocks,),
            in_specs=[
                pl.BlockSpec((tb, Dp), lambda i: (i, 0)),   # z1 batch tile (bf16)
                pl.BlockSpec((tb, Dp), lambda i: (i, 0)),   # z2 batch tile (bf16)
                pl.BlockSpec((Dp, Hp), lambda i: (0, 0)),   # w1 (resident)
                pl.BlockSpec((1, Hp), lambda i: (0, 0)),    # b1 (resident)
                pl.BlockSpec((Hp, Dp), lambda i: (0, 0)),   # w2 (resident)
                pl.BlockSpec((1, Dp), lambda i: (0, 0)),    # b2 (resident)
            ],
            out_specs=pl.BlockSpec((1, 8, 128), lambda i: (i, 0, 0)),
        ),
        # Per-block partial sums -> fully independent grid steps; "parallel" lets the
        # v7x megacore shard the batch axis across both TensorCores.
        compiler_params=pltpu.CompilerParams(
            dimension_semantics=("parallel",),
            vmem_limit_bytes=vmem_limit,
        ),
        cost_estimate=pl.CostEstimate(
            flops=8 * Bp * Dp * Hp,                       # 2 branches x 2 matmuls
            transcendentals=2 * Bp,                       # one rsqrt per row per branch
            bytes_accessed=(2 * Bp * Dp * 2               # z1 + z2 (bf16)
                            + 2 * Dp * Hp * 2             # w1 + w2 (bf16)
                            + num_blocks * 8 * 128 * 4),  # partial-sum slabs
        ),
    )(z1b, z2b, w1p, b1p, w2p, b2p)

    # Tiny final reduce + scale on the host graph: L = -(sum over rows of cos)/ (2*B).
    return jnp.sum(partials[:, 0, 0]) * (-0.5 / B)


def _reference(z1, z2, w1, b1, w2, b2):
    if z1.ndim == 1:
        z1, z2 = z1[None, :], z2[None, :]

    def pred(z):
        h = jnp.maximum(z @ w1 + b1, 0.0)
        return h @ w2 + b2

    p1, p2 = pred(z1), pred(z2)

    def neg_mean_cos(p, z):
        d = jnp.sum(p * z, axis=-1)
        pp = jnp.sum(p * p, axis=-1)
        zz = jnp.sum(z * z, axis=-1)
        return -jnp.mean(d / jnp.sqrt(jnp.maximum(pp * zz, 1e-16)))

    return neg_mean_cos(p1, z2) * 0.5 + neg_mean_cos(p2, z1) * 0.5


if __name__ == "__main__":
    B, D_FEAT, H = 8, 128, 32  # batch, feature dim, predictor hidden dim

    key = jax.random.PRNGKey(0)
    k_z1, k_z2, k_w1, k_w2 = jax.random.split(key, 4)

    z1 = jax.random.normal(k_z1, (B, D_FEAT), dtype=jnp.float32)
    z2 = jax.random.normal(k_z2, (B, D_FEAT), dtype=jnp.float32)

    # Predictor parameters (Linear(D,H) -> ReLU -> Linear(H,D)), stored as (in, out).
    w1 = jax.random.normal(k_w1, (D_FEAT, H), dtype=jnp.float32) * (1.0 / jnp.sqrt(D_FEAT))
    b1 = jnp.zeros((1, H), dtype=jnp.float32)
    w2 = jax.random.normal(k_w2, (H, D_FEAT), dtype=jnp.float32) * (1.0 / jnp.sqrt(H))
    b2 = jnp.zeros((1, D_FEAT), dtype=jnp.float32)

    loss = simsiam_forward(z1, z2, w1, b1, w2, b2)
    loss = jax.block_until_ready(loss)

    ref = _reference(z1, z2, w1, b1, w2, b2)
    assert bool(jnp.isfinite(loss)), "non-finite loss"
    # bf16 MXU operands + bf16-streamed z -> O(1e-3) deviation from the f32 reference.
    assert abs(float(loss) - float(ref)) < 3e-2, (float(loss), float(ref))
    print("KERNEL_OK")
</pallas_src>

<mosaic_0001>
module attributes {stable_mosaic.version = 11 : i64} {
  func.func @_simsiam_kernel(%arg0: i32, %arg1: memref<8x128xbf16, #tpu.memory_space<vmem>>, %arg2: memref<8x128xbf16, #tpu.memory_space<vmem>>, %arg3: memref<128x128xbf16, #tpu.memory_space<vmem>>, %arg4: memref<1x128xf32, #tpu.memory_space<vmem>>, %arg5: memref<128x128xbf16, #tpu.memory_space<vmem>>, %arg6: memref<1x128xf32, #tpu.memory_space<vmem>>, %arg7: memref<1x8x128xf32, #tpu.memory_space<vmem>>) attributes {dimension_semantics = [#tpu.dimension_semantics<parallel>], iteration_bounds = array<i64: 1>, scalar_prefetch = 0 : i64, scratch_operands = 0 : i64, tpu.core_type = #tpu.core_type<tc>, window_params = [{transform_indices = @transform_0, window_bounds = array<i64: 8, 128>}, {transform_indices = @transform_1, window_bounds = array<i64: 8, 128>}, {pipeline_mode = #tpu.pipeline_mode<synchronous>, transform_indices = @transform_2, window_bounds = array<i64: 128, 128>}, {pipeline_mode = #tpu.pipeline_mode<synchronous>, transform_indices = @transform_3, window_bounds = array<i64: 1, 128>}, {pipeline_mode = #tpu.pipeline_mode<synchronous>, transform_indices = @transform_4, window_bounds = array<i64: 128, 128>}, {pipeline_mode = #tpu.pipeline_mode<synchronous>, transform_indices = @transform_5, window_bounds = array<i64: 1, 128>}, {transform_indices = @transform_6, window_bounds = array<i64: 1, 8, 128>}]} {
    %c0 = arith.constant 0 : index
    %c0_0 = arith.constant 0 : index
    %0 = vector.load %arg1[%c0, %c0_0] : memref<8x128xbf16, #tpu.memory_space<vmem>>, vector<8x128xbf16>
    %c0_1 = arith.constant 0 : index
    %c0_2 = arith.constant 0 : index
    %1 = vector.load %arg2[%c0_1, %c0_2] : memref<8x128xbf16, #tpu.memory_space<vmem>>, vector<8x128xbf16>
    %c0_3 = arith.constant 0 : index
    %c0_4 = arith.constant 0 : index
    %2 = vector.load %arg3[%c0_3, %c0_4] : memref<128x128xbf16, #tpu.memory_space<vmem>>, vector<128x128xbf16>
    %c0_5 = arith.constant 0 : index
    %c0_6 = arith.constant 0 : index
    %3 = vector.load %arg5[%c0_5, %c0_6] : memref<128x128xbf16, #tpu.memory_space<vmem>>, vector<128x128xbf16>
    %c0_7 = arith.constant 0 : index
    %c0_8 = arith.constant 0 : index
    %4 = vector.load %arg4[%c0_7, %c0_8] : memref<1x128xf32, #tpu.memory_space<vmem>>, vector<1x128xf32>
    %c0_9 = arith.constant 0 : index
    %c0_10 = arith.constant 0 : index
    %5 = vector.load %arg6[%c0_9, %c0_10] : memref<1x128xf32, #tpu.memory_space<vmem>>, vector<1x128xf32>
    %cst = arith.constant dense<0.000000e+00> : vector<8x128xf32>
    %6 = tpu.matmul %0, %2, %cst {dimension_numbers = #tpu.dot_dimension_numbers<[1], [0], [0], [1], [0, 0, 1, 1], [], []>} : vector<8x128xbf16>, vector<128x128xbf16>, vector<8x128xf32> -> vector<8x128xf32>
    %7 = vector.broadcast %4 : vector<1x128xf32> to vector<8x128xf32>
    %8 = arith.addf %6, %7 : vector<8x128xf32>
    %cst_11 = arith.constant 0.000000e+00 : f32
    %9 = vector.broadcast %cst_11 : f32 to vector<8x128xf32>
    %10 = arith.maximumf %8, %9 : vector<8x128xf32>
    %11 = arith.truncf %10 : vector<8x128xf32> to vector<8x128xbf16>
    %cst_12 = arith.constant dense<0.000000e+00> : vector<8x128xf32>
    %12 = tpu.matmul %11, %3, %cst_12 {dimension_numbers = #tpu.dot_dimension_numbers<[1], [0], [0], [1], [0, 0, 1, 1], [], []>} : vector<8x128xbf16>, vector<128x128xbf16>, vector<8x128xf32> -> vector<8x128xf32>
    %13 = vector.broadcast %5 : vector<1x128xf32> to vector<8x128xf32>
    %14 = arith.addf %12, %13 : vector<8x128xf32>
    %cst_13 = arith.constant dense<0.000000e+00> : vector<8x128xf32>
    %15 = tpu.matmul %1, %2, %cst_13 {dimension_numbers = #tpu.dot_dimension_numbers<[1], [0], [0], [1], [0, 0, 1, 1], [], []>} : vector<8x128xbf16>, vector<128x128xbf16>, vector<8x128xf32> -> vector<8x128xf32>
    %16 = vector.broadcast %4 : vector<1x128xf32> to vector<8x128xf32>
    %17 = arith.addf %15, %16 : vector<8x128xf32>
    %cst_14 = arith.constant 0.000000e+00 : f32
    %18 = vector.broadcast %cst_14 : f32 to vector<8x128xf32>
    %19 = arith.maximumf %17, %18 : vector<8x128xf32>
    %20 = arith.truncf %19 : vector<8x128xf32> to vector<8x128xbf16>
    %cst_15 = arith.constant dense<0.000000e+00> : vector<8x128xf32>
    %21 = tpu.matmul %20, %3, %cst_15 {dimension_numbers = #tpu.dot_dimension_numbers<[1], [0], [0], [1], [0, 0, 1, 1], [], []>} : vector<8x128xbf16>, vector<128x128xbf16>, vector<8x128xf32> -> vector<8x128xf32>
    %22 = vector.broadcast %5 : vector<1x128xf32> to vector<8x128xf32>
    %23 = arith.addf %21, %22 : vector<8x128xf32>
    %24 = arith.extf %0 : vector<8x128xbf16> to vector<8x128xf32>
    %25 = arith.extf %1 : vector<8x128xbf16> to vector<8x128xf32>
    %26 = arith.mulf %14, %25 : vector<8x128xf32>
    %cst_16 = arith.constant dense<0.000000e+00> : vector<8xf32>
    %27 = vector.multi_reduction <add>, %26, %cst_16 [1] : vector<8x128xf32> to vector<8xf32>
    %28 = vector.shape_cast %27 : vector<8xf32> to vector<8x1xf32>
    %29 = arith.mulf %14, %14 : vector<8x128xf32>
    %cst_17 = arith.constant dense<0.000000e+00> : vector<8xf32>
    %30 = vector.multi_reduction <add>, %29, %cst_17 [1] : vector<8x128xf32> to vector<8xf32>
    %31 = vector.shape_cast %30 : vector<8xf32> to vector<8x1xf32>
    %32 = arith.mulf %25, %25 : vector<8x128xf32>
    %cst_18 = arith.constant dense<0.000000e+00> : vector<8xf32>
    %33 = vector.multi_reduction <add>, %32, %cst_18 [1] : vector<8x128xf32> to vector<8xf32>
    %34 = vector.shape_cast %33 : vector<8xf32> to vector<8x1xf32>
    %35 = arith.mulf %31, %34 : vector<8x1xf32>
    %cst_19 = arith.constant 1.000000e-16 : f32
    %36 = vector.broadcast %cst_19 : f32 to vector<8x1xf32>
    %37 = arith.maximumf %35, %36 : vector<8x1xf32>
    %38 = math.rsqrt %37 : vector<8x1xf32>
    %39 = arith.mulf %28, %38 : vector<8x1xf32>
    %40 = arith.mulf %23, %24 : vector<8x128xf32>
    %cst_20 = arith.constant dense<0.000000e+00> : vector<8xf32>
    %41 = vector.multi_reduction <add>, %40, %cst_20 [1] : vector<8x128xf32> to vector<8xf32>
    %42 = vector.shape_cast %41 : vector<8xf32> to vector<8x1xf32>
    %43 = arith.mulf %23, %23 : vector<8x128xf32>
    %cst_21 = arith.constant dense<0.000000e+00> : vector<8xf32>
    %44 = vector.multi_reduction <add>, %43, %cst_21 [1] : vector<8x128xf32> to vector<8xf32>
    %45 = vector.shape_cast %44 : vector<8xf32> to vector<8x1xf32>
    %46 = arith.mulf %24, %24 : vector<8x128xf32>
    %cst_22 = arith.constant dense<0.000000e+00> : vector<8xf32>
    %47 = vector.multi_reduction <add>, %46, %cst_22 [1] : vector<8x128xf32> to vector<8xf32>
    %48 = vector.shape_cast %47 : vector<8xf32> to vector<8x1xf32>
    %49 = arith.mulf %45, %48 : vector<8x1xf32>
    %cst_23 = arith.constant 1.000000e-16 : f32
    %50 = vector.broadcast %cst_23 : f32 to vector<8x1xf32>
    %51 = arith.maximumf %49, %50 : vector<8x1xf32>
    %52 = math.rsqrt %51 : vector<8x1xf32>
    %53 = arith.mulf %42, %52 : vector<8x1xf32>
    %54 = arith.addf %39, %53 : vector<8x1xf32>
    %55 = vector.shape_cast %54 : vector<8x1xf32> to vector<1x8x1xf32>
    %cst_24 = arith.constant dense<0.000000e+00> : vector<1xf32>
    %56 = vector.multi_reduction <add>, %55, %cst_24 [1, 2] : vector<1x8x1xf32> to vector<1xf32>
    %57 = vector.shape_cast %56 : vector<1xf32> to vector<1x1x1xf32>
    %58 = vector.extract %57[0, 0, 0] : f32 from vector<1x1x1xf32>
    %59 = vector.broadcast %58 : f32 to vector<1x8x128xf32>
    %c0_25 = arith.constant 0 : index
    %c0_26 = arith.constant 0 : index
    %c0_27 = arith.constant 0 : index
    %60 = vector.load %arg7[%c0_25, %c0_26, %c0_27] : memref<1x8x128xf32, #tpu.memory_space<vmem>>, vector<1x8x128xf32>
    tpu.vector_store %arg7[%c0_25, %c0_26, %c0_27], %59 {strides = array<i32>} : memref<1x8x128xf32, #tpu.memory_space<vmem>>, vector<1x8x128xf32>,
    return
  }
  func.func @transform_0(%arg0: i32) -> (i32, i32) {
    %c0_i32 = arith.constant 0 : i32
    %c0_i32_0 = arith.constant 0 : i32
    return %arg0, %c0_i32 : i32, i32
  }
  func.func @transform_1(%arg0: i32) -> (i32, i32) {
    %c0_i32 = arith.constant 0 : i32
    %c0_i32_0 = arith.constant 0 : i32
    return %arg0, %c0_i32 : i32, i32
  }
  func.func @transform_2(%arg0: i32) -> (i32, i32) {
    %c0_i32 = arith.constant 0 : i32
    %c0_i32_0 = arith.constant 0 : i32
    %c0_i32_1 = arith.constant 0 : i32
    return %c0_i32, %c0_i32_0 : i32, i32
  }
  func.func @transform_3(%arg0: i32) -> (i32, i32) {
    %c0_i32 = arith.constant 0 : i32
    %c0_i32_0 = arith.constant 0 : i32
    %c0_i32_1 = arith.constant 0 : i32
    return %c0_i32, %c0_i32_0 : i32, i32
  }
  func.func @transform_4(%arg0: i32) -> (i32, i32) {
    %c0_i32 = arith.constant 0 : i32
    %c0_i32_0 = arith.constant 0 : i32
    %c0_i32_1 = arith.constant 0 : i32
    return %c0_i32, %c0_i32_0 : i32, i32
  }
  func.func @transform_5(%arg0: i32) -> (i32, i32) {
    %c0_i32 = arith.constant 0 : i32
    %c0_i32_0 = arith.constant 0 : i32
    %c0_i32_1 = arith.constant 0 : i32
    return %c0_i32, %c0_i32_0 : i32, i32
  }
  func.func @transform_6(%arg0: i32) -> (i32, i32, i32) {
    %c0_i32 = arith.constant 0 : i32
    %c0_i32_0 = arith.constant 0 : i32
    %c0_i32_1 = arith.constant 0 : i32
    return %arg0, %c0_i32, %c0_i32_0 : i32, i32, i32
  }
}

</mosaic_0001>

<llo_original>
// kernel: tpu_custom_call.1
$region0: #{tpu_custom_call.1}
  #allocation0 [shape = 'u32[]', space=smem, size = 0x4, offset = 0x4, fixed_abs, tag = 'smem constant byte address 0x4 - core index']
  #allocation1 [shape = 'u32[144,128]{1,0:T(1,128)}', space=vmem, size = 0x12000, scoped, tag = 'internal scratch']
  %s0 = inlined_call_operand.hbm [shape: bf16[8,128], index: 0, kind: input, shape index: {}]
  %s1 = inlined_call_operand.hbm [shape: bf16[8,128], index: 1, kind: input, shape index: {}]
  %s2 = inlined_call_operand.hbm [shape: bf16[128,128], index: 2, kind: input, shape index: {}]
  %s3 = inlined_call_operand.vmem [shape: f32[1,128], index: 3, kind: input, shape index: {}]
  %s4 = inlined_call_operand.hbm [shape: bf16[128,128], index: 4, kind: input, shape index: {}]
  %s5 = inlined_call_operand.vmem [shape: f32[1,128], index: 5, kind: input, shape index: {}]
  %s6 = inlined_call_operand.hbm [shape: f32[1,8,128], index: 6, kind: output, shape index: {}]
  %s7 = sld [smem:[#allocation0]]
  $region50: #{tpu_custom_call.1} parent=0
    _
  %s9 = ssub.s32 1, %s7
  %s10 = scalar_select 0, %s9, %s7
  $region1: #{tpu_custom_call.1} parent=0
    #allocation2 [shape = 'u8[2048]{0}', space=vmem, size = 0x800, scoped, tag = 'input window, operand 0, single buffered']
    #allocation3 [shape = 's32[1]{0}', space=sflag, size = 0x4, scoped, tag = 'scoped memory for tpu_custom_call.1']
    #allocation4 [shape = 's32[1]{0}', space=sflag, size = 0x4, scoped, tag = 'scoped memory for tpu_custom_call.1']
    #allocation5 [shape = 'u8[2048]{0}', space=vmem, size = 0x800, scoped, tag = 'input window, operand 1, single buffered']
    #allocation6 [shape = 's32[1]{0}', space=sflag, size = 0x4, scoped, tag = 'scoped memory for tpu_custom_call.1']
    #allocation7 [shape = 'u8[32768]{0}', space=vmem, size = 0x8000, scoped, tag = 'input window, operand 2, single buffered']
    #allocation8 [shape = 'u8[32768]{0}', space=vmem, size = 0x8000, scoped, tag = 'input window, operand 4, single buffered']
    #allocation9 [shape = 's32[1]{0}', space=sflag, size = 0x4, scoped, tag = 'scoped memory for tpu_custom_call.1']
    #allocation10 [shape = 'u8[4096]{0}', space=vmem, size = 0x1000, scoped, tag = 'output window, operand 0, single buffered']
    %11 = vsyncpa [#allocation3], 0
    %12 = vsyncpa [#allocation6], 0
    %13 = vsyncpa [#allocation9], 0
    %14 = vsyncpa [#allocation4], 0
    // Predicated region
    $region2: #{tpu_custom_call.1} parent=1 // pred_check
      _
    $region3: #{tpu_custom_call.1} parent=1 // pred_check_branch
      %16 = sbr.rel (0) target = $region5
    $region4: #{tpu_custom_call.1} parent=1 // pred_region
      %s18 = ssub.s32 64, 64
      %19 = vsyncadd [#allocation3], %s18
      %s21 = sshll.u32 [#allocation2], 4
      %s22 = int_to_ptr.vmem [resolvable:$true] %s21
      %24 = dma.hbm_to_vmem [thread:$0]  %s0, 64, %s22, [#allocation3]
    $region5: #{tpu_custom_call.1} parent=1 // pred_fallthru
      _
    // Predicated region
    $region6: #{tpu_custom_call.1} parent=1 // pred_check
      _
    $region7: #{tpu_custom_call.1} parent=1 // pred_check_branch
      %26 = sbr.rel (0) target = $region9
    $region8: #{tpu_custom_call.1} parent=1 // pred_region
      %s28 = ssub.s32 64, 64
      %29 = vsyncadd [#allocation6], %s28
      %s31 = sshll.u32 [#allocation5], 4
      %s32 = int_to_ptr.vmem [resolvable:$true] %s31
      %34 = dma.hbm_to_vmem [thread:$0]  %s1, 64, %s32, [#allocation6]
    $region9: #{tpu_custom_call.1} parent=1 // pred_fallthru
      _
    // Predicated region
    $region10: #{tpu_custom_call.1} parent=1 // pred_check
      _
    $region11: #{tpu_custom_call.1} parent=1 // pred_check_branch
      %36 = sbr.rel (0) target = $region13
    $region12: #{tpu_custom_call.1} parent=1 // pred_region
      %s38 = ssub.s32 1024, 1024
      %39 = vsyncadd [#allocation6], %s38
      %s40 = sshll.u32 [#allocation7], 4
      %s41 = int_to_ptr.vmem [resolvable:$true] %s40
      %46 = dma.hbm_to_vmem [thread:$0]  %s2, 1024, %s41, [#allocation6], 64, 64, 4
    $region13: #{tpu_custom_call.1} parent=1 // pred_fallthru
      _
    // Predicated region
    $region14: #{tpu_custom_call.1} parent=1 // pred_check
      _
    $region15: #{tpu_custom_call.1} parent=1 // pred_check_branch
      %48 = sbr.rel (0) target = $region17
    $region16: #{tpu_custom_call.1} parent=1 // pred_region
      _
    $region17: #{tpu_custom_call.1} parent=1 // pred_fallthru
      _
    // Predicated region
    $region18: #{tpu_custom_call.1} parent=1 // pred_check
      _
    $region19: #{tpu_custom_call.1} parent=1 // pred_check_branch
      %50 = sbr.rel (0) target = $region21
    $region20: #{tpu_custom_call.1} parent=1 // pred_region
      %s52 = ssub.s32 1024, 1024
      %53 = vsyncadd [#allocation9], %s52
      %s54 = sshll.u32 [#allocation8], 4
      %s55 = int_to_ptr.vmem [resolvable:$true] %s54
      %60 = dma.hbm_to_vmem [thread:$0]  %s4, 1024, %s55, [#allocation9], 64, 64, 4
    $region21: #{tpu_custom_call.1} parent=1 // pred_fallthru
      _
    // Predicated region
    $region22: #{tpu_custom_call.1} parent=1 // pred_check
      _
    $region23: #{tpu_custom_call.1} parent=1 // pred_check_branch
      %62 = sbr.rel (0) target = $region25
    $region24: #{tpu_custom_call.1} parent=1 // pred_region
      _
    $region25: #{tpu_custom_call.1} parent=1 // pred_fallthru
      _
    // Predicated region
    $region26: #{tpu_custom_call.1} parent=1 // pred_check
      _
    $region27: #{tpu_custom_call.1} parent=1 // pred_check_branch
      %64 = sbr.rel (0) target = $region29
    $region28: #{tpu_custom_call.1} parent=1 // pred_region
      %65 = dma.done [#allocation3], 64
    $region29: #{tpu_custom_call.1} parent=1 // pred_fallthru
      _
    // Predicated region
    $region30: #{tpu_custom_call.1} parent=1 // pred_check
      _
    $region31: #{tpu_custom_call.1} parent=1 // pred_check_branch
      %67 = sbr.rel (0) target = $region33
    $region32: #{tpu_custom_call.1} parent=1 // pred_region
      %68 = dma.done [#allocation6], 64
    $region33: #{tpu_custom_call.1} parent=1 // pred_fallthru
      _
    // Predicated region
    $region34: #{tpu_custom_call.1} parent=1 // pred_check
      _
    $region35: #{tpu_custom_call.1} parent=1 // pred_check_branch
      %70 = sbr.rel (0) target = $region37
    $region36: #{tpu_custom_call.1} parent=1 // pred_region
      %71 = dma.done [#allocation6], 1024
    $region37: #{tpu_custom_call.1} parent=1 // pred_fallthru
      _
    // Predicated region
    $region38: #{tpu_custom_call.1} parent=1 // pred_check
      _
    $region39: #{tpu_custom_call.1} parent=1 // pred_check_branch
      %73 = sbr.rel (0) target = $region41
    $region40: #{tpu_custom_call.1} parent=1 // pred_region
      %74 = dma.done [#allocation9], 1024
    $region41: #{tpu_custom_call.1} parent=1 // pred_fallthru
      _
    %v76 = vld [vmem:[#allocation2] sm:$0xf]
    %v77 = vld [vmem:[#allocation5] sm:$0xf]
    %v78 = vld [vmem:[#allocation7] sm:$0xf]
    %v79 = vld [vmem:[#allocation7 + $0x4] sm:$0xf]
    %v80 = vld [vmem:[#allocation7 + $0x8] sm:$0xf]
    %v81 = vld [vmem:[#allocation7 + $0xc] sm:$0xf]
    %v82 = vld [vmem:[#allocation7 + $0x10] sm:$0xf]
    %v83 = vld [vmem:[#allocation7 + $0x14] sm:$0xf]
    %v84 = vld [vmem:[#allocation7 + $0x18] sm:$0xf]
    %v85 = vld [vmem:[#allocation7 + $0x1c] sm:$0xf]
    %v86 = vld [vmem:[#allocation7 + $0x20] sm:$0xf]
    %v87 = vld [vmem:[#allocation7 + $0x24] sm:$0xf]
    %v88 = vld [vmem:[#allocation7 + $0x28] sm:$0xf]
    %v89 = vld [vmem:[#allocation7 + $0x2c] sm:$0xf]
    %v90 = vld [vmem:[#allocation7 + $0x30] sm:$0xf]
    %v91 = vld [vmem:[#allocation7 + $0x34] sm:$0xf]
    %v92 = vld [vmem:[#allocation7 + $0x38] sm:$0xf]
    %v93 = vld [vmem:[#allocation7 + $0x3c] sm:$0xf]
    %v94 = vld [vmem:[#allocation8] sm:$0xf]
    %v95 = vld [vmem:[#allocation8 + $0x4] sm:$0xf]
    %v96 = vld [vmem:[#allocation8 + $0x8] sm:$0xf]
    %v97 = vld [vmem:[#allocation8 + $0xc] sm:$0xf]
    %v98 = vld [vmem:[#allocation8 + $0x10] sm:$0xf]
    %v99 = vld [vmem:[#allocation8 + $0x14] sm:$0xf]
    %v100 = vld [vmem:[#allocation8 + $0x18] sm:$0xf]
    %v101 = vld [vmem:[#allocation8 + $0x1c] sm:$0xf]
    %v102 = vld [vmem:[#allocation8 + $0x20] sm:$0xf]
    %v103 = vld [vmem:[#allocation8 + $0x24] sm:$0xf]
    %v104 = vld [vmem:[#allocation8 + $0x28] sm:$0xf]
    %v105 = vld [vmem:[#allocation8 + $0x2c] sm:$0xf]
    %v106 = vld [vmem:[#allocation8 + $0x30] sm:$0xf]
    %v107 = vld [vmem:[#allocation8 + $0x34] sm:$0xf]
    %v108 = vld [vmem:[#allocation8 + $0x38] sm:$0xf]
    %v109 = vld [vmem:[#allocation8 + $0x3c] sm:$0xf]
    %v110 = vld [vmem:[%s3] sm:$0x1]
    %v111 = vld [vmem:[%s5] sm:$0x1]
    %v113 = vlaneseq
    %v114 = vshrl.u32 %v113, 7
    %v115 = vsub.s32 0, %v114
    %v116 = vrot.slane %v110, %v115
    %v134 = vunpack.c.l.b16 %v78
    %v135 = vunpack.c.l.b16 %v79
    %v136 = vunpack.c.l.b16 %v80
    %v137 = vunpack.c.l.b16 %v81
    %v138 = vunpack.c.l.b16 %v82
    %v139 = vunpack.c.l.b16 %v83
    %v140 = vunpack.c.l.b16 %v84
    %v141 = vunpack.c.l.b16 %v85
    %v142 = vunpack.c.l.b16 %v86
    %v143 = vunpack.c.l.b16 %v87
    %v144 = vunpack.c.l.b16 %v88
    %v145 = vunpack.c.l.b16 %v89
    %v146 = vunpack.c.l.b16 %v90
    %v147 = vunpack.c.l.b16 %v91
    %v148 = vunpack.c.l.b16 %v92
    %v149 = vunpack.c.l.b16 %v93
    %v150 = vpack.c.b16 %v135, %v134
    %v151 = vpack.c.b16 %v137, %v136
    %v152 = vpack.c.b16 %v139, %v138
    %v153 = vpack.c.b16 %v141, %v140
    %v154 = vpack.c.b16 %v143, %v142
    %v155 = vpack.c.b16 %v145, %v144
    %v156 = vpack.c.b16 %v147, %v146
    %v157 = vpack.c.b16 %v149, %v148
    %166 = vmatprep.subr.bf16.mxu0 0
    %167 = vmatpush1.bf16.msra.mxu0 %v157
    %168 = vmatprep.subr.bf16.mxu0 0
    %169 = vmatpush1.bf16.msra.mxu0 %v156
    %170 = vmatprep.subr.bf16.mxu0 0
    %171 = vmatpush1.bf16.msra.mxu0 %v155
    %172 = vmatprep.subr.bf16.mxu0 0
    %173 = vmatpush1.bf16.msra.mxu0 %v154
    %174 = vmatprep.subr.bf16.mxu0 0
    %175 = vmatpush1.bf16.msra.mxu0 %v153
    %176 = vmatprep.subr.bf16.mxu0 0
    %177 = vmatpush1.bf16.msra.mxu0 %v152
    %178 = vmatprep.subr.bf16.mxu0 0
    %179 = vmatpush1.bf16.msra.mxu0 %v151
    %180 = vmatprep.subr.bf16.mxu0 0
    %181 = vmatpush1.bf16.msra.mxu0 %v150
    %182 = vmatprep.subr.bf16.mxu0 0
    %183 = vmatpush2.bf16.msra.mxu0 0
    %184 = vmatprep.subr.bf16.mxu0 0
    %185 = vmatpush2.bf16.msra.mxu0 0
    %186 = vmatprep.subr.bf16.mxu0 0
    %187 = vmatpush2.bf16.msra.mxu0 0
    %188 = vmatprep.subr.bf16.mxu0 0
    %189 = vmatpush2.bf16.msra.mxu0 0
    %190 = vmatprep.subr.bf16.mxu0 0
    %191 = vmatpush2.bf16.msra.mxu0 0
    %192 = vmatprep.subr.bf16.mxu0 0
    %193 = vmatpush2.bf16.msra.mxu0 0
    %194 = vmatprep.subr.bf16.mxu0 0
    %195 = vmatpush2.bf16.msra.mxu0 0
    %196 = vmatprep.subr.bf16.mxu0 0
    %197 = vmatpush2.bf16.msra.mxu0 0
    %198 = vmatprep.mubr.bf16.mxu0 0
    %199 = vmatmul.mubr.bf16.gmra.mxu0 %v76
    %v200 = vpop.f32.mrf.mxu0
    %v201 = vadd.f32 %v116, %v200
    %v202 = vpop.f32.mrf.mxu0
    %v203 = vpop.f32.mrf.mxu0
    %v204 = vpop.f32.mrf.mxu0
    %205 = vdwg.mxu0
    %v206 = vmax.f32 %v201, 0.0
    %v207 = vpack.c.bf16 %v206, %v206
    %v209 = vlaneseq
    %v210 = vshrl.u32 %v209, 7
    %v211 = vsub.s32 0, %v210
    %v212 = vrot.slane %v111, %v211
    %v230 = vunpack.c.l.b16 %v94
    %v231 = vunpack.c.l.b16 %v95
    %v232 = vunpack.c.l.b16 %v96
    %v233 = vunpack.c.l.b16 %v97
    %v234 = vunpack.c.l.b16 %v98
    %v235 = vunpack.c.l.b16 %v99
    %v236 = vunpack.c.l.b16 %v100
    %v237 = vunpack.c.l.b16 %v101
    %v238 = vunpack.c.l.b16 %v102
    %v239 = vunpack.c.l.b16 %v103
    %v240 = vunpack.c.l.b16 %v104
    %v241 = vunpack.c.l.b16 %v105
    %v242 = vunpack.c.l.b16 %v106
    %v243 = vunpack.c.l.b16 %v107
    %v244 = vunpack.c.l.b16 %v108
    %v245 = vunpack.c.l.b16 %v109
    %v246 = vpack.c.b16 %v231, %v230
    %v247 = vpack.c.b16 %v233, %v232
    %v248 = vpack.c.b16 %v235, %v234
    %v249 = vpack.c.b16 %v237, %v236
    %v250 = vpack.c.b16 %v239, %v238
    %v251 = vpack.c.b16 %v241, %v240
    %v252 = vpack.c.b16 %v243, %v242
    %v253 = vpack.c.b16 %v245, %v244
    %262 = vmatprep.subr.bf16.mxu0 0
    %263 = vmatpush1.bf16.msra.mxu0 %v253
    %264 = vmatprep.subr.bf16.mxu0 0
    %265 = vmatpush1.bf16.msra.mxu0 %v252
    %266 = vmatprep.subr.bf16.mxu0 0
    %267 = vmatpush1.bf16.msra.mxu0 %v251
    %268 = vmatprep.subr.bf16.mxu0 0
    %269 = vmatpush1.bf16.msra.mxu0 %v250
    %270 = vmatprep.subr.bf16.mxu0 0
    %271 = vmatpush1.bf16.msra.mxu0 %v249
    %272 = vmatprep.subr.bf16.mxu0 0
    %273 = vmatpush1.bf16.msra.mxu0 %v248
    %274 = vmatprep.subr.bf16.mxu0 0
    %275 = vmatpush1.bf16.msra.mxu0 %v247
    %276 = vmatprep.subr.bf16.mxu0 0
    %277 = vmatpush1.bf16.msra.mxu0 %v246
    %278 = vmatprep.subr.bf16.mxu0 0
    %279 = vmatpush2.bf16.msra.mxu0 0
    %280 = vmatprep.subr.bf16.mxu0 0
    %281 = vmatpush2.bf16.msra.mxu0 0
    %282 = vmatprep.subr.bf16.mxu0 0
    %283 = vmatpush2.bf16.msra.mxu0 0
    %284 = vmatprep.subr.bf16.mxu0 0
    %285 = vmatpush2.bf16.msra.mxu0 0
    %286 = vmatprep.subr.bf16.mxu0 0
    %287 = vmatpush2.bf16.msra.mxu0 0
    %288 = vmatprep.subr.bf16.mxu0 0
    %289 = vmatpush2.bf16.msra.mxu0 0
    %290 = vmatprep.subr.bf16.mxu0 0
    %291 = vmatpush2.bf16.msra.mxu0 0
    %292 = vmatprep.subr.bf16.mxu0 0
    %293 = vmatpush2.bf16.msra.mxu0 0
    %294 = vmatprep.mubr.bf16.mxu0 0
    %295 = vmatmul.mubr.bf16.gmra.mxu0 %v207
    %v296 = vpop.f32.mrf.mxu0
    %v297 = vadd.f32 %v212, %v296
    %v298 = vpop.f32.mrf.mxu0
    %v299 = vpop.f32.mrf.mxu0
    %v300 = vpop.f32.mrf.mxu0
    %301 = vdwg.mxu0
    %302 = vmatprep.subr.bf16.mxu0 0
    %303 = vmatpush1.bf16.msra.mxu0 %v157
    %304 = vmatprep.subr.bf16.mxu0 0
    %305 = vmatpush1.bf16.msra.mxu0 %v156
    %306 = vmatprep.subr.bf16.mxu0 0
    %307 = vmatpush1.bf16.msra.mxu0 %v155
    %308 = vmatprep.subr.bf16.mxu0 0
    %309 = vmatpush1.bf16.msra.mxu0 %v154
    %310 = vmatprep.subr.bf16.mxu0 0
    %311 = vmatpush1.bf16.msra.mxu0 %v153
    %312 = vmatprep.subr.bf16.mxu0 0
    %313 = vmatpush1.bf16.msra.mxu0 %v152
    %314 = vmatprep.subr.bf16.mxu0 0
    %315 = vmatpush1.bf16.msra.mxu0 %v151
    %316 = vmatprep.subr.bf16.mxu0 0
    %317 = vmatpush1.bf16.msra.mxu0 %v150
    %318 = vmatprep.subr.bf16.mxu0 0
    %319 = vmatpush2.bf16.msra.mxu0 0
    %320 = vmatprep.subr.bf16.mxu0 0
    %321 = vmatpush2.bf16.msra.mxu0 0
    %322 = vmatprep.subr.bf16.mxu0 0
    %323 = vmatpush2.bf16.msra.mxu0 0
    %324 = vmatprep.subr.bf16.mxu0 0
    %325 = vmatpush2.bf16.msra.mxu0 0
    %326 = vmatprep.subr.bf16.mxu0 0
    %327 = vmatpush2.bf16.msra.mxu0 0
    %328 = vmatprep.subr.bf16.mxu0 0
    %329 = vmatpush2.bf16.msra.mxu0 0
    %330 = vmatprep.subr.bf16.mxu0 0
    %331 = vmatpush2.bf16.msra.mxu0 0
    %332 = vmatprep.subr.bf16.mxu0 0
    %333 = vmatpush2.bf16.msra.mxu0 0
    %334 = vmatprep.mubr.bf16.mxu0 0
    %335 = vmatmul.mubr.bf16.gmra.mxu0 %v77
    %v336 = vpop.f32.mrf.mxu0
    %v337 = vadd.f32 %v116, %v336
    %v338 = vpop.f32.mrf.mxu0
    %v339 = vpop.f32.mrf.mxu0
    %v340 = vpop.f32.mrf.mxu0
    %341 = vdwg.mxu0
    %v342 = vmax.f32 %v337, 0.0
    %v343 = vpack.c.bf16 %v342, %v342
    %344 = vmatprep.subr.bf16.mxu0 0
    %345 = vmatpush1.bf16.msra.mxu0 %v253
    %346 = vmatprep.subr.bf16.mxu0 0
    %347 = vmatpush1.bf16.msra.mxu0 %v252
    %348 = vmatprep.subr.bf16.mxu0 0
    %349 = vmatpush1.bf16.msra.mxu0 %v251
    %350 = vmatprep.subr.bf16.mxu0 0
    %351 = vmatpush1.bf16.msra.mxu0 %v250
    %352 = vmatprep.subr.bf16.mxu0 0
    %353 = vmatpush1.bf16.msra.mxu0 %v249
    %354 = vmatprep.subr.bf16.mxu0 0
    %355 = vmatpush1.bf16.msra.mxu0 %v248
    %356 = vmatprep.subr.bf16.mxu0 0
    %357 = vmatpush1.bf16.msra.mxu0 %v247
    %358 = vmatprep.subr.bf16.mxu0 0
    %359 = vmatpush1.bf16.msra.mxu0 %v246
    %360 = vmatprep.subr.bf16.mxu0 0
    %361 = vmatpush2.bf16.msra.mxu0 0
    %362 = vmatprep.subr.bf16.mxu0 0
    %363 = vmatpush2.bf16.msra.mxu0 0
    %364 = vmatprep.subr.bf16.mxu0 0
    %365 = vmatpush2.bf16.msra.mxu0 0
    %366 = vmatprep.subr.bf16.mxu0 0
    %367 = vmatpush2.bf16.msra.mxu0 0
    %368 = vmatprep.subr.bf16.mxu0 0
    %369 = vmatpush2.bf16.msra.mxu0 0
    %370 = vmatprep.subr.bf16.mxu0 0
    %371 = vmatpush2.bf16.msra.mxu0 0
    %372 = vmatprep.subr.bf16.mxu0 0
    %373 = vmatpush2.bf16.msra.mxu0 0
    %374 = vmatprep.subr.bf16.mxu0 0
    %375 = vmatpush2.bf16.msra.mxu0 0
    %376 = vmatprep.mubr.bf16.mxu0 0
    %377 = vmatmul.mubr.bf16.gmra.mxu0 %v343
    %v378 = vpop.f32.mrf.mxu0
    %v379 = vadd.f32 %v212, %v378
    %v380 = vpop.f32.mrf.mxu0
    %v381 = vpop.f32.mrf.mxu0
    %v382 = vpop.f32.mrf.mxu0
    %383 = vdwg.mxu0
    %v384 = vunpack.c.l.bf16 %v76
    %v385 = vunpack.c.l.bf16 %v77
    %v386 = vmul.f32 %v297, %v385
    %387 = vadd.xlane.f32.xlu0 %v386
    %v388 = vpop.xlane.xlu0 %387
    %v389 = vmul.f32 %v297, %v297
    %390 = vadd.xlane.f32.xlu0 %v389
    %v391 = vpop.xlane.xlu0 %390
    %v392 = vmul.f32 %v385, %v385
    %393 = vadd.xlane.f32.xlu0 %v392
    %v394 = vpop.xlane.xlu0 %393
    %v395 = vmul.f32 %v391, %v394
    %v396 = vmax.f32 %v395, 1e-16
    %v397 = vrsqrt.pop %v396
    %v398 = vmul.f32 %v388, %v397
    %v399 = vmul.f32 %v379, %v384
    %400 = vadd.xlane.f32.xlu0 %v399
    %v401 = vpop.xlane.xlu0 %400
    %v402 = vmul.f32 %v379, %v379
    %403 = vadd.xlane.f32.xlu0 %v402
    %v404 = vpop.xlane.xlu0 %403
    %v405 = vmul.f32 %v384, %v384
    %406 = vadd.xlane.f32.xlu0 %v405
    %v407 = vpop.xlane.xlu0 %406
    %v408 = vmul.f32 %v404, %v407
    %v409 = vmax.f32 %v408, 1e-16
    %v410 = vrsqrt.pop %v409
    %v411 = vmul.f32 %v401, %v410
    %v412 = vadd.f32 %v398, %v411
    %vm413 = vcmask 7168
    %v414 = vsel %vm413, %v412, 0.0
    %415 = vadd.xlane.f32.xlu0 %v414
    %v416 = vpop.xlane.xlu0 %415
    %v417 = vrot.slane %v416, 4
    %v418 = vadd.f32 %v416, %v417
    %v419 = vrot.slane %v418, 2
    %v420 = vadd.f32 %v418, %v419
    %v421 = vrot.slane %v420, 1
    %v422 = vadd.f32 %v420, %v421
    %s423 = vtos %v422
    %v424 = vstv %s423
    %425 = vst [vmem:[#allocation10] sm:$0xff] %v424
    // Predicated region
    $region42: #{tpu_custom_call.1} parent=1 // pred_check
      _
    $region43: #{tpu_custom_call.1} parent=1 // pred_check_branch
      %427 = sbr.rel (0) target = $region45
    $region44: #{tpu_custom_call.1} parent=1 // pred_region
      %s429 = ssub.s32 128, 128
      %430 = vsyncadd [#allocation4], %s429
      %s432 = sshll.u32 [#allocation10], 4
      %s433 = int_to_ptr.vmem [resolvable:$true] %s432
      %435 = dma.vmem_to_hbm [thread:$0]  %s433, 128, %s6, [#allocation4]
    $region45: #{tpu_custom_call.1} parent=1 // pred_fallthru
      _
    // Predicated region
    $region46: #{tpu_custom_call.1} parent=1 // pred_check
      _
    $region47: #{tpu_custom_call.1} parent=1 // pred_check_branch
      %437 = sbr.rel (0) target = $region49
    $region48: #{tpu_custom_call.1} parent=1 // pred_region
      %438 = dma.done [#allocation4], 128
    $region49: #{tpu_custom_call.1} parent=1 // pred_fallthru
      _
    %439 = vsyncpa [#allocation3], 1
    %440 = vsyncpa [#allocation6], 1
    %441 = vsyncpa [#allocation9], 1
    %442 = vsyncpa [#allocation4], 1

</llo_original>
